<compile_context>
chip_gen: v7x
topology: tpu7x:2x2x1
jax: 0.10.0
libtpu: 0.0.40
codegen_flags: <defaults>
</compile_context>

<pallas_src>
import jax
import jax.numpy as jnp
from jax.experimental import pallas as pl
from jax.experimental.pallas import tpu as pltpu

_LANES = 128
_SUBLANES = 8
_MAX_TILE_ROWS = 4096   # 4096 x 128 x 4 B = 2 MiB per f32 buffer
_MIN_GRID = 2           # keep >= 2 grid steps so v7x's two TensorCores both work
_NEG_SLOPE = 0.01       # PyTorch nn.LeakyReLU default negative_slope
_HIDDEN = 10


def _round_up(n, m):
    return ((n + m - 1) // m) * m


def simplenet_kernel(params_ref, x_ref, o_ref):
    """params_ref: SMEM f32[32] = [w1(10) | b1(10) | v(10)=0.99*w2 | c1 | c0].

    Computes  y = c0 + c1*x + sum_j v_j * relu(w1_j*x + b1_j)
    which equals  fc2(LeakyReLU_0.01(fc1(x)))  exactly (up to f32 rounding order).
    x_ref / o_ref: VMEM (tile_rows, 128) f32 tiles of the flattened batch.
    """
    x = x_ref[...]
    acc = x * params_ref[3 * _HIDDEN] + params_ref[3 * _HIDDEN + 1]   # c1*x + c0
    for j in range(_HIDDEN):   # fully unrolled: ~5 VPU ops per hidden unit
        h = x * params_ref[j] + params_ref[_HIDDEN + j]
        acc = acc + params_ref[2 * _HIDDEN + j] * jnp.maximum(h, 0.0)
    o_ref[...] = acc.astype(o_ref.dtype)


def _pack_params(w1, b1, w2, b2):
    """Fold the LeakyReLU linear branch into the weights: 32 scalars for SMEM."""
    w1f = w1.reshape(-1).astype(jnp.float32)   # (10,)
    b1f = b1.reshape(-1).astype(jnp.float32)   # (10,)
    w2f = w2.reshape(-1).astype(jnp.float32)   # (10,)
    b2f = b2.reshape(-1).astype(jnp.float32)   # (1,)
    v = (1.0 - _NEG_SLOPE) * w2f                       # 0.99 * w2_j
    c1 = _NEG_SLOPE * jnp.sum(w2f * w1f)               # 0.01 * sum w2*w1
    c0 = b2f[0] + _NEG_SLOPE * jnp.sum(w2f * b1f)      # b2 + 0.01 * sum w2*b1
    return jnp.concatenate([w1f, b1f, v, jnp.stack([c1, c0])])   # (32,)


def _simplenet_pallas(x, w1, b1, w2, b2):
    """Kernel path. x: (B, 1); params in PyTorch layout."""
    B = x.shape[0]
    params = _pack_params(w1, b1, w2, b2)

    # Lane-dense layout: view the batch as (rows, 128) f32.  Pad only up to a
    # multiple of 1024 elements (8 sublanes x 128 lanes) so rows is
    # sublane-aligned; for 1024-aligned batches both the pad and the final
    # slice are skipped entirely (zero extra HBM passes).
    # TODO(synk): for misaligned B, handle the tail in-kernel (pl.ANY + manual
    # DMA with a clamped pl.ds) to kill the remaining pad/slice HBM passes.
    B_pad = _round_up(B, _SUBLANES * _LANES)
    xf = x.reshape(-1).astype(jnp.float32)
    if B_pad != B:
        xf = jnp.pad(xf, (0, B_pad - B))
    rows = B_pad // _LANES                     # multiple of 8
    x2d = xf.reshape(rows, _LANES)             # free view

    # Largest tile (amortizes ~0.35 us/step) subject to: VMEM headroom on v5e
    # (<= 2 MiB/buffer) and grid length >= 2 for v7x megacore.  The final grid
    # block may be partial; Pallas masks the out-of-bounds rows.
    tile_rows = min(_MAX_TILE_ROWS,
                    _round_up(pl.cdiv(rows, _MIN_GRID), _SUBLANES))
    grid = (pl.cdiv(rows, tile_rows),)

    out2d = pl.pallas_call(
        simplenet_kernel,
        out_shape=jax.ShapeDtypeStruct((rows, _LANES), jnp.float32),
        grid_spec=pltpu.PrefetchScalarGridSpec(
            num_scalar_prefetch=1,                     # params -> SMEM, loaded once
            grid=grid,
            in_specs=[pl.BlockSpec((tile_rows, _LANES), lambda i, p: (i, 0))],
            out_specs=pl.BlockSpec((tile_rows, _LANES), lambda i, p: (i, 0)),
        ),
        compiler_params=pltpu.CompilerParams(
            dimension_semantics=("parallel",)),        # megacore split on v7x
    )(params, x2d)

    out = out2d.reshape(-1)
    if B_pad != B:
        out = out[:B]
    return out.reshape(B, 1).astype(x.dtype)


def simplenet_forward(x, w1, b1, w2, b2, *, kernel_batch_threshold=4096):
    """Forward pass matching SimpleNet. x: (B, 1) float32.
    w1: (10, 1), b1: (10,), w2: (1, 10), b2: (1,) — PyTorch layouts."""
    if x.shape[0] < kernel_batch_threshold:
        # Launch + pipeline prologue dwarfs a few rows of work; let XLA fuse it.
        return reference_forward(x, w1, b1, w2, b2)
    return _simplenet_pallas(x, w1, b1, w2, b2)


def reference_forward(x, w1, b1, w2, b2):
    h = x @ w1.T + b1
    h = jnp.where(h >= 0.0, h, _NEG_SLOPE * h)
    return h @ w2.T + b2


def init_params(key):
    """Deterministic init mimicking PyTorch's default U(-1/sqrt(fan_in), 1/sqrt(fan_in))."""
    k1, k2, k3, k4 = jax.random.split(key, 4)
    bound1 = 1.0 / jnp.sqrt(1.0)    # fc1 fan_in = 1
    bound2 = 1.0 / jnp.sqrt(10.0)   # fc2 fan_in = 10
    w1 = jax.random.uniform(k1, (10, 1), jnp.float32, -bound1, bound1)
    b1 = jax.random.uniform(k2, (10,), jnp.float32, -bound1, bound1)
    w2 = jax.random.uniform(k3, (1, 10), jnp.float32, -bound2, bound2)
    b2 = jax.random.uniform(k4, (1,), jnp.float32, -bound2, bound2)
    return w1, b1, w2, b2


if __name__ == "__main__":
    key = jax.random.PRNGKey(0)
    kx, kp = jax.random.split(key)
    w1, b1, w2, b2 = init_params(kp)

    # Small batch (force kernel path; pad path, single grid step).
    batch = 8
    x = jax.random.normal(kx, (batch, 1), jnp.float32)
    out = jax.block_until_ready(
        simplenet_forward(x, w1, b1, w2, b2, kernel_batch_threshold=0))
    ref = reference_forward(x, w1, b1, w2, b2)
    assert out.shape == (batch, 1)
    assert jnp.allclose(out, ref, atol=1e-5, rtol=1e-5)

    # 1024-aligned batch: zero-copy path (no pad / no slice), 2-step grid.
    batch2 = 4096
    x2 = jax.random.normal(kx, (batch2, 1), jnp.float32)
    out2 = jax.block_until_ready(
        simplenet_forward(x2, w1, b1, w2, b2, kernel_batch_threshold=0))
    ref2 = reference_forward(x2, w1, b1, w2, b2)
    assert out2.shape == (batch2, 1)
    assert jnp.allclose(out2, ref2, atol=1e-5, rtol=1e-5)

    # Misaligned batch: exercises pad, uneven final grid block, tail slice.
    batch3 = 2051
    x3 = jax.random.normal(kx, (batch3, 1), jnp.float32)
    out3 = jax.block_until_ready(
        simplenet_forward(x3, w1, b1, w2, b2, kernel_batch_threshold=0))
    ref3 = reference_forward(x3, w1, b1, w2, b2)
    assert out3.shape == (batch3, 1)
    assert jnp.allclose(out3, ref3, atol=1e-5, rtol=1e-5)

    print("KERNEL_OK")
</pallas_src>

<mosaic_0001>
module attributes {stable_mosaic.version = 11 : i64} {
  func.func @simplenet_kernel(%arg0: i32, %arg1: memref<32xf32, #tpu.memory_space<smem>>, %arg2: memref<8x128xf32, #tpu.memory_space<vmem>>, %arg3: memref<8x128xf32, #tpu.memory_space<vmem>>) attributes {dimension_semantics = [#tpu.dimension_semantics<parallel>], iteration_bounds = array<i64: 1>, scalar_prefetch = 1 : i64, scratch_operands = 0 : i64, tpu.core_type = #tpu.core_type<tc>, window_params = [{transform_indices = @transform_0, window_bounds = array<i64: 8, 128>}, {transform_indices = @transform_1, window_bounds = array<i64: 8, 128>}]} {
    %c0 = arith.constant 0 : index
    %c0_0 = arith.constant 0 : index
    %0 = vector.load %arg2[%c0, %c0_0] : memref<8x128xf32, #tpu.memory_space<vmem>>, vector<8x128xf32>
    %c30 = arith.constant 30 : index
    %1 = memref.load %arg1[%c30] : memref<32xf32, #tpu.memory_space<smem>>
    %2 = vector.broadcast %1 : f32 to vector<8x128xf32>
    %3 = arith.mulf %0, %2 : vector<8x128xf32>
    %c31 = arith.constant 31 : index
    %4 = memref.load %arg1[%c31] : memref<32xf32, #tpu.memory_space<smem>>
    %5 = vector.broadcast %4 : f32 to vector<8x128xf32>
    %6 = arith.addf %3, %5 : vector<8x128xf32>
    %c0_1 = arith.constant 0 : index
    %7 = memref.load %arg1[%c0_1] : memref<32xf32, #tpu.memory_space<smem>>
    %8 = vector.broadcast %7 : f32 to vector<8x128xf32>
    %9 = arith.mulf %0, %8 : vector<8x128xf32>
    %c10 = arith.constant 10 : index
    %10 = memref.load %arg1[%c10] : memref<32xf32, #tpu.memory_space<smem>>
    %11 = vector.broadcast %10 : f32 to vector<8x128xf32>
    %12 = arith.addf %9, %11 : vector<8x128xf32>
    %c20 = arith.constant 20 : index
    %13 = memref.load %arg1[%c20] : memref<32xf32, #tpu.memory_space<smem>>
    %cst = arith.constant 0.000000e+00 : f32
    %14 = vector.broadcast %cst : f32 to vector<8x128xf32>
    %15 = arith.maximumf %12, %14 : vector<8x128xf32>
    %16 = vector.broadcast %13 : f32 to vector<8x128xf32>
    %17 = arith.mulf %16, %15 : vector<8x128xf32>
    %18 = arith.addf %6, %17 : vector<8x128xf32>
    %c1 = arith.constant 1 : index
    %19 = memref.load %arg1[%c1] : memref<32xf32, #tpu.memory_space<smem>>
    %20 = vector.broadcast %19 : f32 to vector<8x128xf32>
    %21 = arith.mulf %0, %20 : vector<8x128xf32>
    %c11 = arith.constant 11 : index
    %22 = memref.load %arg1[%c11] : memref<32xf32, #tpu.memory_space<smem>>
    %23 = vector.broadcast %22 : f32 to vector<8x128xf32>
    %24 = arith.addf %21, %23 : vector<8x128xf32>
    %c21 = arith.constant 21 : index
    %25 = memref.load %arg1[%c21] : memref<32xf32, #tpu.memory_space<smem>>
    %cst_2 = arith.constant 0.000000e+00 : f32
    %26 = vector.broadcast %cst_2 : f32 to vector<8x128xf32>
    %27 = arith.maximumf %24, %26 : vector<8x128xf32>
    %28 = vector.broadcast %25 : f32 to vector<8x128xf32>
    %29 = arith.mulf %28, %27 : vector<8x128xf32>
    %30 = arith.addf %18, %29 : vector<8x128xf32>
    %c2 = arith.constant 2 : index
    %31 = memref.load %arg1[%c2] : memref<32xf32, #tpu.memory_space<smem>>
    %32 = vector.broadcast %31 : f32 to vector<8x128xf32>
    %33 = arith.mulf %0, %32 : vector<8x128xf32>
    %c12 = arith.constant 12 : index
    %34 = memref.load %arg1[%c12] : memref<32xf32, #tpu.memory_space<smem>>
    %35 = vector.broadcast %34 : f32 to vector<8x128xf32>
    %36 = arith.addf %33, %35 : vector<8x128xf32>
    %c22 = arith.constant 22 : index
    %37 = memref.load %arg1[%c22] : memref<32xf32, #tpu.memory_space<smem>>
    %cst_3 = arith.constant 0.000000e+00 : f32
    %38 = vector.broadcast %cst_3 : f32 to vector<8x128xf32>
    %39 = arith.maximumf %36, %38 : vector<8x128xf32>
    %40 = vector.broadcast %37 : f32 to vector<8x128xf32>
    %41 = arith.mulf %40, %39 : vector<8x128xf32>
    %42 = arith.addf %30, %41 : vector<8x128xf32>
    %c3 = arith.constant 3 : index
    %43 = memref.load %arg1[%c3] : memref<32xf32, #tpu.memory_space<smem>>
    %44 = vector.broadcast %43 : f32 to vector<8x128xf32>
    %45 = arith.mulf %0, %44 : vector<8x128xf32>
    %c13 = arith.constant 13 : index
    %46 = memref.load %arg1[%c13] : memref<32xf32, #tpu.memory_space<smem>>
    %47 = vector.broadcast %46 : f32 to vector<8x128xf32>
    %48 = arith.addf %45, %47 : vector<8x128xf32>
    %c23 = arith.constant 23 : index
    %49 = memref.load %arg1[%c23] : memref<32xf32, #tpu.memory_space<smem>>
    %cst_4 = arith.constant 0.000000e+00 : f32
    %50 = vector.broadcast %cst_4 : f32 to vector<8x128xf32>
    %51 = arith.maximumf %48, %50 : vector<8x128xf32>
    %52 = vector.broadcast %49 : f32 to vector<8x128xf32>
    %53 = arith.mulf %52, %51 : vector<8x128xf32>
    %54 = arith.addf %42, %53 : vector<8x128xf32>
    %c4 = arith.constant 4 : index
    %55 = memref.load %arg1[%c4] : memref<32xf32, #tpu.memory_space<smem>>
    %56 = vector.broadcast %55 : f32 to vector<8x128xf32>
    %57 = arith.mulf %0, %56 : vector<8x128xf32>
    %c14 = arith.constant 14 : index
    %58 = memref.load %arg1[%c14] : memref<32xf32, #tpu.memory_space<smem>>
    %59 = vector.broadcast %58 : f32 to vector<8x128xf32>
    %60 = arith.addf %57, %59 : vector<8x128xf32>
    %c24 = arith.constant 24 : index
    %61 = memref.load %arg1[%c24] : memref<32xf32, #tpu.memory_space<smem>>
    %cst_5 = arith.constant 0.000000e+00 : f32
    %62 = vector.broadcast %cst_5 : f32 to vector<8x128xf32>
    %63 = arith.maximumf %60, %62 : vector<8x128xf32>
    %64 = vector.broadcast %61 : f32 to vector<8x128xf32>
    %65 = arith.mulf %64, %63 : vector<8x128xf32>
    %66 = arith.addf %54, %65 : vector<8x128xf32>
    %c5 = arith.constant 5 : index
    %67 = memref.load %arg1[%c5] : memref<32xf32, #tpu.memory_space<smem>>
    %68 = vector.broadcast %67 : f32 to vector<8x128xf32>
    %69 = arith.mulf %0, %68 : vector<8x128xf32>
    %c15 = arith.constant 15 : index
    %70 = memref.load %arg1[%c15] : memref<32xf32, #tpu.memory_space<smem>>
    %71 = vector.broadcast %70 : f32 to vector<8x128xf32>
    %72 = arith.addf %69, %71 : vector<8x128xf32>
    %c25 = arith.constant 25 : index
    %73 = memref.load %arg1[%c25] : memref<32xf32, #tpu.memory_space<smem>>
    %cst_6 = arith.constant 0.000000e+00 : f32
    %74 = vector.broadcast %cst_6 : f32 to vector<8x128xf32>
    %75 = arith.maximumf %72, %74 : vector<8x128xf32>
    %76 = vector.broadcast %73 : f32 to vector<8x128xf32>
    %77 = arith.mulf %76, %75 : vector<8x128xf32>
    %78 = arith.addf %66, %77 : vector<8x128xf32>
    %c6 = arith.constant 6 : index
    %79 = memref.load %arg1[%c6] : memref<32xf32, #tpu.memory_space<smem>>
    %80 = vector.broadcast %79 : f32 to vector<8x128xf32>
    %81 = arith.mulf %0, %80 : vector<8x128xf32>
    %c16 = arith.constant 16 : index
    %82 = memref.load %arg1[%c16] : memref<32xf32, #tpu.memory_space<smem>>
    %83 = vector.broadcast %82 : f32 to vector<8x128xf32>
    %84 = arith.addf %81, %83 : vector<8x128xf32>
    %c26 = arith.constant 26 : index
    %85 = memref.load %arg1[%c26] : memref<32xf32, #tpu.memory_space<smem>>
    %cst_7 = arith.constant 0.000000e+00 : f32
    %86 = vector.broadcast %cst_7 : f32 to vector<8x128xf32>
    %87 = arith.maximumf %84, %86 : vector<8x128xf32>
    %88 = vector.broadcast %85 : f32 to vector<8x128xf32>
    %89 = arith.mulf %88, %87 : vector<8x128xf32>
    %90 = arith.addf %78, %89 : vector<8x128xf32>
    %c7 = arith.constant 7 : index
    %91 = memref.load %arg1[%c7] : memref<32xf32, #tpu.memory_space<smem>>
    %92 = vector.broadcast %91 : f32 to vector<8x128xf32>
    %93 = arith.mulf %0, %92 : vector<8x128xf32>
    %c17 = arith.constant 17 : index
    %94 = memref.load %arg1[%c17] : memref<32xf32, #tpu.memory_space<smem>>
    %95 = vector.broadcast %94 : f32 to vector<8x128xf32>
    %96 = arith.addf %93, %95 : vector<8x128xf32>
    %c27 = arith.constant 27 : index
    %97 = memref.load %arg1[%c27] : memref<32xf32, #tpu.memory_space<smem>>
    %cst_8 = arith.constant 0.000000e+00 : f32
    %98 = vector.broadcast %cst_8 : f32 to vector<8x128xf32>
    %99 = arith.maximumf %96, %98 : vector<8x128xf32>
    %100 = vector.broadcast %97 : f32 to vector<8x128xf32>
    %101 = arith.mulf %100, %99 : vector<8x128xf32>
    %102 = arith.addf %90, %101 : vector<8x128xf32>
    %c8 = arith.constant 8 : index
    %103 = memref.load %arg1[%c8] : memref<32xf32, #tpu.memory_space<smem>>
    %104 = vector.broadcast %103 : f32 to vector<8x128xf32>
    %105 = arith.mulf %0, %104 : vector<8x128xf32>
    %c18 = arith.constant 18 : index
    %106 = memref.load %arg1[%c18] : memref<32xf32, #tpu.memory_space<smem>>
    %107 = vector.broadcast %106 : f32 to vector<8x128xf32>
    %108 = arith.addf %105, %107 : vector<8x128xf32>
    %c28 = arith.constant 28 : index
    %109 = memref.load %arg1[%c28] : memref<32xf32, #tpu.memory_space<smem>>
    %cst_9 = arith.constant 0.000000e+00 : f32
    %110 = vector.broadcast %cst_9 : f32 to vector<8x128xf32>
    %111 = arith.maximumf %108, %110 : vector<8x128xf32>
    %112 = vector.broadcast %109 : f32 to vector<8x128xf32>
    %113 = arith.mulf %112, %111 : vector<8x128xf32>
    %114 = arith.addf %102, %113 : vector<8x128xf32>
    %c9 = arith.constant 9 : index
    %115 = memref.load %arg1[%c9] : memref<32xf32, #tpu.memory_space<smem>>
    %116 = vector.broadcast %115 : f32 to vector<8x128xf32>
    %117 = arith.mulf %0, %116 : vector<8x128xf32>
    %c19 = arith.constant 19 : index
    %118 = memref.load %arg1[%c19] : memref<32xf32, #tpu.memory_space<smem>>
    %119 = vector.broadcast %118 : f32 to vector<8x128xf32>
    %120 = arith.addf %117, %119 : vector<8x128xf32>
    %c29 = arith.constant 29 : index
    %121 = memref.load %arg1[%c29] : memref<32xf32, #tpu.memory_space<smem>>
    %cst_10 = arith.constant 0.000000e+00 : f32
    %122 = vector.broadcast %cst_10 : f32 to vector<8x128xf32>
    %123 = arith.maximumf %120, %122 : vector<8x128xf32>
    %124 = vector.broadcast %121 : f32 to vector<8x128xf32>
    %125 = arith.mulf %124, %123 : vector<8x128xf32>
    %126 = arith.addf %114, %125 : vector<8x128xf32>
    %c0_11 = arith.constant 0 : index
    %c0_12 = arith.constant 0 : index
    %127 = vector.load %arg3[%c0_11, %c0_12] : memref<8x128xf32, #tpu.memory_space<vmem>>, vector<8x128xf32>
    tpu.vector_store %arg3[%c0_11, %c0_12], %126 {strides = array<i32>} : memref<8x128xf32, #tpu.memory_space<vmem>>, vector<8x128xf32>,
    return
  }
  func.func @transform_0(%arg0: i32, %arg1: memref<32xf32, #tpu.memory_space<smem>>) -> (i32, i32) {
    %c0_i32 = arith.constant 0 : i32
    %c0_i32_0 = arith.constant 0 : i32
    return %arg0, %c0_i32 : i32, i32
  }
  func.func @transform_1(%arg0: i32, %arg1: memref<32xf32, #tpu.memory_space<smem>>) -> (i32, i32) {
    %c0_i32 = arith.constant 0 : i32
    %c0_i32_0 = arith.constant 0 : i32
    return %arg0, %c0_i32 : i32, i32
  }
}

</mosaic_0001>

<llo_original>
// kernel: tpu_custom_call.1
$region0: #{tpu_custom_call.1}
  #allocation0 [shape = 'u32[]', space=smem, size = 0x4, offset = 0x4, fixed_abs, tag = 'smem constant byte address 0x4 - core index']
  #allocation1 [shape = 'u32[144,128]{1,0:T(1,128)}', space=vmem, size = 0x12000, scoped, tag = 'internal scratch']
  #allocation2 [shape = 's32[1]{0}', space=sflag, size = 0x4, scoped, tag = 'scoped memory for tpu_custom_call.1']
  #allocation3 [shape = 'u8[512]{0}', space=smem, size = 0x200, scoped, tag = 'prefetched SMEM operand 0']
  %s0 = inlined_call_operand.hbm [shape: f32[32], index: 0, kind: input, shape index: {}]
  %s1 = inlined_call_operand.hbm [shape: f32[8,128], index: 1, kind: input, shape index: {}]
  %s2 = inlined_call_operand.hbm [shape: f32[8,128], index: 2, kind: output, shape index: {}]
  %s3 = sld [smem:[#allocation0]]
  $region18: #{tpu_custom_call.1} parent=0
    _
  %s5 = ssub.s32 1, %s3
  %s6 = scalar_select 0, %s5, %s3
  %8 = dma.hbm_to_smem %s0, 16, [#allocation3], [#allocation2]
  %9 = dma.done [#allocation2], 16
  %10 = sfence
  $region1: #{tpu_custom_call.1} parent=0
    #allocation4 [shape = 'u8[4096]{0}', space=vmem, size = 0x1000, scoped, tag = 'input window, operand 1, single buffered']
    #allocation5 [shape = 's32[1]{0}', space=sflag, size = 0x4, scoped, tag = 'scoped memory for tpu_custom_call.1']
    #allocation6 [shape = 's32[1]{0}', space=sflag, size = 0x4, scoped, tag = 'scoped memory for tpu_custom_call.1']
    #allocation7 [shape = 'u8[4096]{0}', space=vmem, size = 0x1000, scoped, tag = 'output window, operand 0, single buffered']
    %11 = vsyncpa [#allocation5], 0
    %12 = vsyncpa [#allocation6], 0
    // Predicated region
    $region2: #{tpu_custom_call.1} parent=1 // pred_check
      _
    $region3: #{tpu_custom_call.1} parent=1 // pred_check_branch
      %14 = sbr.rel (0) target = $region5
    $region4: #{tpu_custom_call.1} parent=1 // pred_region
      %s16 = ssub.s32 128, 128
      %17 = vsyncadd [#allocation5], %s16
      %s19 = sshll.u32 [#allocation4], 4
      %s20 = int_to_ptr.vmem [resolvable:$true] %s19
      %22 = dma.hbm_to_vmem [thread:$0]  %s1, 128, %s20, [#allocation5]
    $region5: #{tpu_custom_call.1} parent=1 // pred_fallthru
      _
    // Predicated region
    $region6: #{tpu_custom_call.1} parent=1 // pred_check
      _
    $region7: #{tpu_custom_call.1} parent=1 // pred_check_branch
      %24 = sbr.rel (0) target = $region9
    $region8: #{tpu_custom_call.1} parent=1 // pred_region
      %25 = dma.done [#allocation5], 128
    $region9: #{tpu_custom_call.1} parent=1 // pred_fallthru
      _
    %v26 = vld [vmem:[#allocation4] sm:$0xff]
    %s27 = sld [smem:[#allocation3 + $0x1e]]
    %v28 = vstv %s27
    %v29 = vmul.f32 %v26, %v28
    %s30 = sld [smem:[#allocation3 + $0x1f]]
    %v31 = vstv %s30
    %v32 = vadd.f32 %v29, %v31
    %s33 = sld [smem:[#allocation3]]
    %v34 = vstv %s33
    %v35 = vmul.f32 %v26, %v34
    %s36 = sld [smem:[#allocation3 + $0xa]]
    %v37 = vstv %s36
    %v38 = vadd.f32 %v35, %v37
    %s39 = sld [smem:[#allocation3 + $0x14]]
    %v40 = vmax.f32 %v38, 0.0
    %v41 = vstv %s39
    %v42 = vmul.f32 %v41, %v40
    %v43 = vadd.f32 %v32, %v42
    %s44 = sld [smem:[#allocation3 + $0x1]]
    %v45 = vstv %s44
    %v46 = vmul.f32 %v26, %v45
    %s47 = sld [smem:[#allocation3 + $0xb]]
    %v48 = vstv %s47
    %v49 = vadd.f32 %v46, %v48
    %s50 = sld [smem:[#allocation3 + $0x15]]
    %v51 = vmax.f32 %v49, 0.0
    %v52 = vstv %s50
    %v53 = vmul.f32 %v52, %v51
    %v54 = vadd.f32 %v43, %v53
    %s55 = sld [smem:[#allocation3 + $0x2]]
    %v56 = vstv %s55
    %v57 = vmul.f32 %v26, %v56
    %s58 = sld [smem:[#allocation3 + $0xc]]
    %v59 = vstv %s58
    %v60 = vadd.f32 %v57, %v59
    %s61 = sld [smem:[#allocation3 + $0x16]]
    %v62 = vmax.f32 %v60, 0.0
    %v63 = vstv %s61
    %v64 = vmul.f32 %v63, %v62
    %v65 = vadd.f32 %v54, %v64
    %s66 = sld [smem:[#allocation3 + $0x3]]
    %v67 = vstv %s66
    %v68 = vmul.f32 %v26, %v67
    %s69 = sld [smem:[#allocation3 + $0xd]]
    %v70 = vstv %s69
    %v71 = vadd.f32 %v68, %v70
    %s72 = sld [smem:[#allocation3 + $0x17]]
    %v73 = vmax.f32 %v71, 0.0
    %v74 = vstv %s72
    %v75 = vmul.f32 %v74, %v73
    %v76 = vadd.f32 %v65, %v75
    %s77 = sld [smem:[#allocation3 + $0x4]]
    %v78 = vstv %s77
    %v79 = vmul.f32 %v26, %v78
    %s80 = sld [smem:[#allocation3 + $0xe]]
    %v81 = vstv %s80
    %v82 = vadd.f32 %v79, %v81
    %s83 = sld [smem:[#allocation3 + $0x18]]
    %v84 = vmax.f32 %v82, 0.0
    %v85 = vstv %s83
    %v86 = vmul.f32 %v85, %v84
    %v87 = vadd.f32 %v76, %v86
    %s88 = sld [smem:[#allocation3 + $0x5]]
    %v89 = vstv %s88
    %v90 = vmul.f32 %v26, %v89
    %s91 = sld [smem:[#allocation3 + $0xf]]
    %v92 = vstv %s91
    %v93 = vadd.f32 %v90, %v92
    %s94 = sld [smem:[#allocation3 + $0x19]]
    %v95 = vmax.f32 %v93, 0.0
    %v96 = vstv %s94
    %v97 = vmul.f32 %v96, %v95
    %v98 = vadd.f32 %v87, %v97
    %s99 = sld [smem:[#allocation3 + $0x6]]
    %v100 = vstv %s99
    %v101 = vmul.f32 %v26, %v100
    %s102 = sld [smem:[#allocation3 + $0x10]]
    %v103 = vstv %s102
    %v104 = vadd.f32 %v101, %v103
    %s105 = sld [smem:[#allocation3 + $0x1a]]
    %v106 = vmax.f32 %v104, 0.0
    %v107 = vstv %s105
    %v108 = vmul.f32 %v107, %v106
    %v109 = vadd.f32 %v98, %v108
    %s110 = sld [smem:[#allocation3 + $0x7]]
    %v111 = vstv %s110
    %v112 = vmul.f32 %v26, %v111
    %s113 = sld [smem:[#allocation3 + $0x11]]
    %v114 = vstv %s113
    %v115 = vadd.f32 %v112, %v114
    %s116 = sld [smem:[#allocation3 + $0x1b]]
    %v117 = vmax.f32 %v115, 0.0
    %v118 = vstv %s116
    %v119 = vmul.f32 %v118, %v117
    %v120 = vadd.f32 %v109, %v119
    %s121 = sld [smem:[#allocation3 + $0x8]]
    %v122 = vstv %s121
    %v123 = vmul.f32 %v26, %v122
    %s124 = sld [smem:[#allocation3 + $0x12]]
    %v125 = vstv %s124
    %v126 = vadd.f32 %v123, %v125
    %s127 = sld [smem:[#allocation3 + $0x1c]]
    %v128 = vmax.f32 %v126, 0.0
    %v129 = vstv %s127
    %v130 = vmul.f32 %v129, %v128
    %v131 = vadd.f32 %v120, %v130
    %s132 = sld [smem:[#allocation3 + $0x9]]
    %v133 = vstv %s132
    %v134 = vmul.f32 %v26, %v133
    %s135 = sld [smem:[#allocation3 + $0x13]]
    %v136 = vstv %s135
    %v137 = vadd.f32 %v134, %v136
    %s138 = sld [smem:[#allocation3 + $0x1d]]
    %v139 = vmax.f32 %v137, 0.0
    %v140 = vstv %s138
    %v141 = vmul.f32 %v140, %v139
    %v142 = vadd.f32 %v131, %v141
    %143 = vst [vmem:[#allocation7] sm:$0xff] %v142
    // Predicated region
    $region10: #{tpu_custom_call.1} parent=1 // pred_check
      _
    $region11: #{tpu_custom_call.1} parent=1 // pred_check_branch
      %145 = sbr.rel (0) target = $region13
    $region12: #{tpu_custom_call.1} parent=1 // pred_region
      %s147 = ssub.s32 128, 128
      %148 = vsyncadd [#allocation6], %s147
      %s150 = sshll.u32 [#allocation7], 4
      %s151 = int_to_ptr.vmem [resolvable:$true] %s150
      %153 = dma.vmem_to_hbm [thread:$0]  %s151, 128, %s2, [#allocation6]
    $region13: #{tpu_custom_call.1} parent=1 // pred_fallthru
      _
    // Predicated region
    $region14: #{tpu_custom_call.1} parent=1 // pred_check
      _
    $region15: #{tpu_custom_call.1} parent=1 // pred_check_branch
      %155 = sbr.rel (0) target = $region17
    $region16: #{tpu_custom_call.1} parent=1 // pred_region
      %156 = dma.done [#allocation6], 128
    $region17: #{tpu_custom_call.1} parent=1 // pred_fallthru
      _
    %157 = vsyncpa [#allocation5], 1
    %158 = vsyncpa [#allocation6], 1

</llo_original>
